<compile_context>
chip_gen: v5e
topology: v5e:2x2
jax: 0.10.0
libtpu: 0.0.40
codegen_flags: <defaults>
</compile_context>

<pallas_src>
import jax
import jax.numpy as jnp
import numpy as np
from jax.experimental import pallas as pl
from jax.experimental.pallas import tpu as pltpu


def _policy_kernel(x_ref, w_ref, o_ref):
    # x_ref: (Bt, S, E) batch tile
    # w_ref: (1, E)     fused avgpool+linear weight (f32)
    # o_ref: (Bt, S)    softmax(scores) over S, lane-dense
    x = x_ref[...].astype(jnp.float32)                     # (Bt, S, E)
    w = w_ref[...]                                         # (1, E)

    # Fused AvgPool1d(K) ∘ Linear(D->1, no bias): logits[b,s] = Σ_e x[b,s,e]*w[e]
    logits = jnp.sum(x * w, axis=-1)                       # (Bt, S)

    # Softmax over the sequence dimension (last dim here, lane axis).
    m = jnp.max(logits, axis=-1, keepdims=True)            # (Bt, 1)
    e = jnp.exp(logits - m)                                # (Bt, S)
    denom = jnp.sum(e, axis=-1, keepdims=True)             # (Bt, 1)
    o_ref[...] = (e / denom).astype(o_ref.dtype)           # exact divide


def _round_up(v, m):
    return (v + m - 1) // m * m


def _choose_block_b(B, S, E, itemsize):
    """VMEM- and TensorCore-aware batch tile size."""
    # Per-batch-row VMEM footprint of the x block (lane dim padded to 128,
    # sublane dim padded to 8).
    row_bytes = _round_up(S, 8) * _round_up(E, 128) * itemsize
    budget = 24 << 20                       # double-buffered x budget (v7x-safe)
    bb = max(8, (budget // (2 * row_bytes)) // 8 * 8)
    if B >= 16:
        # >= 2 grid steps so both v7x TensorCores get work (no-op on v5e/v6e).
        bb = max(8, min(bb, (B // 2) // 8 * 8))
    bb = min(bb, B)
    if bb < 8:
        bb = B                              # tiny batch: single full-B block
    return int(bb)


def policy_forward(x, weight, kernel_size, *, block_b=None):
    """x: (B, S, E); weight: (1, D) torch Linear weight layout; E == D*kernel_size."""
    B, S, E = x.shape
    D = weight.shape[-1]
    assert E == D * kernel_size, "encoder_embed_dim must be D * kernel_size"

    # Fuse AvgPool1d(K) and Linear(D->1) into one (1, E) weight vector:
    #   w_fused[e] = weight[0, e // K] / K
    w_fused = (jnp.repeat(weight[0].astype(jnp.float32), kernel_size)
               / jnp.float32(kernel_size)).reshape(1, E)   # (1, E)

    itemsize = jnp.dtype(x.dtype).itemsize
    if block_b is None:
        block_b = _choose_block_b(B, S, E, itemsize)
    grid_b = pl.cdiv(B, block_b)

    # Explicit VMEM limit derived from the chosen blocks (double-buffered).
    x_block_bytes = block_b * _round_up(S, 8) * _round_up(E, 128) * itemsize
    out_block_bytes = _round_up(block_b, 8) * _round_up(S, 128) * 4
    vmem_limit = int(min(48 << 20,
                         max(16 << 20,
                             2 * x_block_bytes + 2 * out_block_bytes + (2 << 20))))

    cost = pl.CostEstimate(
        flops=2 * B * S * E + 4 * B * S,
        transcendentals=B * S,
        bytes_accessed=B * S * E * itemsize + B * S * 4 + E * 4,
    )

    out = pl.pallas_call(
        _policy_kernel,
        out_shape=jax.ShapeDtypeStruct((B, S), jnp.float32),
        grid=(grid_b,),
        in_specs=[
            pl.BlockSpec((block_b, S, E), lambda b: (b, 0, 0)),
            pl.BlockSpec((1, E), lambda b: (0, 0)),
        ],
        out_specs=pl.BlockSpec((block_b, S), lambda b: (b, 0)),
        compiler_params=pltpu.CompilerParams(
            dimension_semantics=("parallel",),
            vmem_limit_bytes=vmem_limit),
        cost_estimate=cost,
    )(x, w_fused)

    return out                                             # (B, S)


def _reference(x, weight, kernel_size):
    """Pure-JAX reference mirroring the PyTorch forward."""
    B, S, E = x.shape
    D = weight.shape[-1]
    down = jnp.mean(x.reshape(B, S, D, kernel_size).astype(jnp.float32),
                    axis=-1)                               # AvgPool1d
    logits = jnp.einsum("bsd,d->bs", down, weight[0].astype(jnp.float32))
    return jax.nn.softmax(logits, axis=1)                  # Softmax(dim=1)


if __name__ == "__main__":
    # args.encoder_embed_dim = 32, args.policy_network_dim = 8 -> kernel_size = 4
    E, D = 32, 8
    kernel_size = E // D

    key = jax.random.PRNGKey(0)
    kx, kw, kx2 = jax.random.split(key, 3)

    # mask_policy_layer.weight has shape (out_features=1, in_features=D)
    weight = jax.random.normal(kw, (1, D), dtype=jnp.float32) * 0.1

    # Case 1: small batch, single grid step (block_b == B).
    B, S = 2, 8
    x = jax.random.normal(kx, (B, S, E), dtype=jnp.float32)
    mask_scores = jax.block_until_ready(policy_forward(x, weight, kernel_size))
    ref = _reference(x, weight, kernel_size)
    np.testing.assert_allclose(np.asarray(mask_scores), np.asarray(ref),
                               rtol=1e-4, atol=1e-6)
    assert mask_scores.shape == (B, S)
    np.testing.assert_allclose(np.asarray(mask_scores).sum(axis=1),
                               np.ones(B, np.float32), rtol=1e-5, atol=1e-5)

    # Case 2: larger batch exercising multiple grid steps (batch tiling).
    B2 = 16
    x2 = jax.random.normal(kx2, (B2, S, E), dtype=jnp.float32)
    mask_scores2 = jax.block_until_ready(
        policy_forward(x2, weight, kernel_size))            # auto block_b=8, grid=2
    ref2 = _reference(x2, weight, kernel_size)
    np.testing.assert_allclose(np.asarray(mask_scores2), np.asarray(ref2),
                               rtol=1e-4, atol=1e-6)

    # Case 3: explicit block_b override with a ragged last block (B % block_b != 0).
    mask_scores3 = jax.block_until_ready(
        policy_forward(x2, weight, kernel_size, block_b=B2))
    np.testing.assert_allclose(np.asarray(mask_scores3), np.asarray(ref2),
                               rtol=1e-4, atol=1e-6)

    print("KERNEL_OK")
</pallas_src>

<mosaic_0001>
module attributes {stable_mosaic.version = 11 : i64} {
  func.func @_policy_kernel(%arg0: i32, %arg1: memref<2x8x32xf32, #tpu.memory_space<vmem>>, %arg2: memref<1x32xf32, #tpu.memory_space<vmem>>, %arg3: memref<2x8xf32, #tpu.memory_space<vmem>>) attributes {dimension_semantics = [#tpu.dimension_semantics<parallel>], iteration_bounds = array<i64: 1>, scalar_prefetch = 0 : i64, scratch_operands = 0 : i64, tpu.core_type = #tpu.core_type<tc>, window_params = [{transform_indices = @transform_0, window_bounds = array<i64: 2, 8, 32>}, {pipeline_mode = #tpu.pipeline_mode<synchronous>, transform_indices = @transform_1, window_bounds = array<i64: 1, 32>}, {transform_indices = @transform_2, window_bounds = array<i64: 2, 8>}]} {
    %c0 = arith.constant 0 : index
    %c0_0 = arith.constant 0 : index
    %c0_1 = arith.constant 0 : index
    %0 = vector.load %arg1[%c0, %c0_0, %c0_1] : memref<2x8x32xf32, #tpu.memory_space<vmem>>, vector<2x8x32xf32>
    %c0_2 = arith.constant 0 : index
    %c0_3 = arith.constant 0 : index
    %1 = vector.load %arg2[%c0_2, %c0_3] : memref<1x32xf32, #tpu.memory_space<vmem>>, vector<1x32xf32>
    %2 = vector.shape_cast %1 : vector<1x32xf32> to vector<1x1x32xf32>
    %3 = vector.broadcast %2 : vector<1x1x32xf32> to vector<2x8x32xf32>
    %4 = arith.mulf %0, %3 : vector<2x8x32xf32>
    %cst = arith.constant dense<0.000000e+00> : vector<2x8xf32>
    %5 = vector.multi_reduction <add>, %4, %cst [2] : vector<2x8x32xf32> to vector<2x8xf32>
    %cst_4 = arith.constant dense<0xFF800000> : vector<2xf32>
    %6 = vector.multi_reduction <maximumf>, %5, %cst_4 [1] : vector<2x8xf32> to vector<2xf32>
    %7 = vector.shape_cast %6 : vector<2xf32> to vector<2x1xf32>
    %8 = vector.broadcast %7 : vector<2x1xf32> to vector<2x8xf32>
    %9 = arith.subf %5, %8 : vector<2x8xf32>
    %10 = math.exp %9 : vector<2x8xf32>
    %cst_5 = arith.constant dense<0.000000e+00> : vector<2xf32>
    %11 = vector.multi_reduction <add>, %10, %cst_5 [1] : vector<2x8xf32> to vector<2xf32>
    %12 = vector.shape_cast %11 : vector<2xf32> to vector<2x1xf32>
    %13 = vector.broadcast %12 : vector<2x1xf32> to vector<2x8xf32>
    %14 = arith.divf %10, %13 : vector<2x8xf32>
    %c0_6 = arith.constant 0 : index
    %c0_7 = arith.constant 0 : index
    %15 = vector.load %arg3[%c0_6, %c0_7] : memref<2x8xf32, #tpu.memory_space<vmem>>, vector<2x8xf32>
    tpu.vector_store %arg3[%c0_6, %c0_7], %14 {strides = array<i32>} : memref<2x8xf32, #tpu.memory_space<vmem>>, vector<2x8xf32>,
    return
  }
  func.func @transform_0(%arg0: i32) -> (i32, i32, i32) {
    %c0_i32 = arith.constant 0 : i32
    %c0_i32_0 = arith.constant 0 : i32
    %c0_i32_1 = arith.constant 0 : i32
    return %arg0, %c0_i32, %c0_i32_0 : i32, i32, i32
  }
  func.func @transform_1(%arg0: i32) -> (i32, i32) {
    %c0_i32 = arith.constant 0 : i32
    %c0_i32_0 = arith.constant 0 : i32
    %c0_i32_1 = arith.constant 0 : i32
    return %c0_i32, %c0_i32_0 : i32, i32
  }
  func.func @transform_2(%arg0: i32) -> (i32, i32) {
    %c0_i32 = arith.constant 0 : i32
    %c0_i32_0 = arith.constant 0 : i32
    return %arg0, %c0_i32 : i32, i32
  }
}

</mosaic_0001>

<llo_original>
// kernel: tpu_custom_call.1
$region0: #{tpu_custom_call.1}
  #allocation0 [shape = 'u32[]', space=smem, size = 0x4, offset = 0x4, fixed_abs, tag = 'smem constant byte address 0x4 - core index']
  #allocation1 [shape = 'u32[72,128]{1,0:T(1,128)}', space=vmem, size = 0x9000, scoped, tag = 'internal scratch']
  %s0 = inlined_call_operand.hbm [shape: f32[2,8,32], index: 0, kind: input, shape index: {}]
  %s1 = inlined_call_operand.hbm [shape: f32[1,32], index: 1, kind: input, shape index: {}]
  %s2 = inlined_call_operand.hbm [shape: f32[2,8], index: 2, kind: output, shape index: {}]
  %s3 = sld [smem:[#allocation0]]
  $region26: #{tpu_custom_call.1} parent=0
    _
  %s5 = ssub.s32 1, %s3
  %s6 = scalar_select 0, %s5, %s3
  $region1: #{tpu_custom_call.1} parent=0
    #allocation2 [shape = 'u8[8192]{0}', space=vmem, size = 0x2000, scoped, tag = 'input window, operand 0, single buffered']
    #allocation3 [shape = 's32[1]{0}', space=sflag, size = 0x4, scoped, tag = 'scoped memory for tpu_custom_call.1']
    #allocation4 [shape = 's32[1]{0}', space=sflag, size = 0x4, scoped, tag = 'scoped memory for tpu_custom_call.1']
    #allocation5 [shape = 'u8[512]{0}', space=vmem, size = 0x400, scoped, tag = 'input window, operand 1, single buffered']
    #allocation6 [shape = 's32[1]{0}', space=sflag, size = 0x4, scoped, tag = 'scoped memory for tpu_custom_call.1']
    #allocation7 [shape = 'u8[1024]{0}', space=vmem, size = 0x400, scoped, tag = 'output window, operand 0, single buffered']
    %7 = vsyncpa [#allocation3], 0
    %8 = vsyncpa [#allocation6], 0
    %9 = vsyncpa [#allocation4], 0
    // Predicated region
    $region2: #{tpu_custom_call.1} parent=1 // pred_check
      _
    $region3: #{tpu_custom_call.1} parent=1 // pred_check_branch
      %11 = sbr.rel (0) target = $region5
    $region4: #{tpu_custom_call.1} parent=1 // pred_region
      %13 = vsyncadd [#allocation3], 0
      %s14 = sshll.u32 %s0, 4
      %s15 = int_to_ptr.hbm [resolvable:$true] %s14
      %s16 = sshll.u32 [#allocation2], 4
      %s17 = int_to_ptr.vmem [resolvable:$true] %s16
      %22 = dma.hbm_to_vmem [thread:$0]  %s15, 256, %s17, [#allocation3], 128, 128, 8
    $region5: #{tpu_custom_call.1} parent=1 // pred_fallthru
      _
    // Predicated region
    $region6: #{tpu_custom_call.1} parent=1 // pred_check
      _
    $region7: #{tpu_custom_call.1} parent=1 // pred_check_branch
      %24 = sbr.rel (0) target = $region9
    $region8: #{tpu_custom_call.1} parent=1 // pred_region
      %26 = vsyncadd [#allocation6], 0
      %s28 = sshll.u32 %s1, 4
      %s29 = int_to_ptr.hbm [resolvable:$true] %s28
      %s30 = sshll.u32 [#allocation5], 4
      %s31 = int_to_ptr.vmem [resolvable:$true] %s30
      %33 = dma.hbm_to_vmem [thread:$0]  %s29, 16, %s31, [#allocation6]
    $region9: #{tpu_custom_call.1} parent=1 // pred_fallthru
      _
    // Predicated region
    $region10: #{tpu_custom_call.1} parent=1 // pred_check
      _
    $region11: #{tpu_custom_call.1} parent=1 // pred_check_branch
      %35 = sbr.rel (0) target = $region13
    $region12: #{tpu_custom_call.1} parent=1 // pred_region
      %37 = dma.done [#allocation3], 256
    $region13: #{tpu_custom_call.1} parent=1 // pred_fallthru
      _
    // Predicated region
    $region14: #{tpu_custom_call.1} parent=1 // pred_check
      _
    $region15: #{tpu_custom_call.1} parent=1 // pred_check_branch
      %39 = sbr.rel (0) target = $region17
    $region16: #{tpu_custom_call.1} parent=1 // pred_region
      %41 = dma.done [#allocation6], 16
    $region17: #{tpu_custom_call.1} parent=1 // pred_fallthru
      _
    %v42 = vld [vmem:[#allocation2] sm:$0xff]
    %v43 = vld [vmem:[#allocation2 + $0x8] sm:$0xff]
    %v44 = vld [vmem:[#allocation5] sm:$0x1]
    %v46 = vperm.slane %v44, 0
    %v48 = vmul.f32 %v42, %v46
    %v49 = vmul.f32 %v43, %v46
    %vm50 = vcmask 261120
    %v51 = vsel %vm50, %v48, 0.0
    %52 = vadd.xlane.f32.xlu0 %v51
    %v53 = vpop.xlane.xlu0 %52
    %v54 = vsel %vm50, %v49, 0.0
    %55 = vadd.xlane.f32.xlu0 %v54
    %v56 = vpop.xlane.xlu0 %55
    %v59 = vlaneseq
    %v60 = vand.u32 %v59, 127
    %v61 = vperm.slane %v53, %v60
    %v62 = vperm.slane %v56, %v60
    %vm63 = vcmask 1041409
    %v64 = vsel %vm63, %v62, %v61
    %vm66 = vcmask 58368
    %v67 = vsel %vm66, %v64, -inf
    %68 = vmax.xlane.f32.xlu0 %v67
    %v69 = vpop.xlane.xlu0 %68
    %v71 = vperm.slane %v69, 0
    %v72 = vperm.slane %v69, 1
    %v75 = vsub.f32 %v53, %v71
    %v76 = vsub.f32 %v56, %v72
    %v77 = vmul.f32 %v75, 1.442695
    %v78 = vpow.pop %v77
    %v79 = vmul.f32 %v76, 1.442695
    %v80 = vpow.pop %v79
    %83 = vset.pattern.permute.xlu0 0
    %84 = vperm.xlu0 %83, %v78
    %v85 = vpop.permute.xlu0 %84
    %86 = vset.pattern.permute.xlu0 0
    %87 = vperm.xlu0 %86, %v80
    %v88 = vpop.permute.xlu0 %87
    %v89 = vperm.slane %v85, %v60
    %v90 = vperm.slane %v88, %v60
    %v91 = vsel %vm63, %v90, %v89
    %v93 = vsel %vm66, %v91, 0.0
    %94 = vadd.xlane.f32.xlu0 %v93
    %v95 = vpop.xlane.xlu0 %94
    %v97 = vperm.slane %v95, 0
    %v98 = vperm.slane %v95, 1
    %v101 = vrcp.pop %v97
    %v102 = vmul.f32 %v97, %v101
    %v103 = vsub.f32 1.0, %v102
    %v104 = vmul.f32 %v101, %v103
    %v105 = vadd.f32 %v101, %v104
    %vm106 = vweird.f32 %v97
    %vm107 = vweird.f32 %v101
    %vm108 = vmor %vm106, %vm107
    %v109 = vsel %vm108, %v101, %v105
    %v110 = vand.u32 2147483647, %v97
    %vm111 = vcmp.eq.f32.partialorder %v110, 8.507059e+37
    %v112 = vand.u32 %v97, 2147483648
    %v113 = vor.u32 1.1754944e-38, %v112
    %v114 = vsel %vm111, %v113, %v109
    %v115 = vmul.f32 %v78, %v114
    %v116 = vrcp.pop %v98
    %v117 = vmul.f32 %v98, %v116
    %v118 = vsub.f32 1.0, %v117
    %v119 = vmul.f32 %v116, %v118
    %v120 = vadd.f32 %v116, %v119
    %vm121 = vweird.f32 %v98
    %vm122 = vweird.f32 %v116
    %vm123 = vmor %vm121, %vm122
    %v124 = vsel %vm123, %v116, %v120
    %v125 = vand.u32 2147483647, %v98
    %vm126 = vcmp.eq.f32.partialorder %v125, 8.507059e+37
    %v127 = vand.u32 %v98, 2147483648
    %v128 = vor.u32 1.1754944e-38, %v127
    %v129 = vsel %vm126, %v128, %v124
    %v130 = vmul.f32 %v80, %v129
    %133 = vset.pattern.permute.xlu0 0
    %134 = vperm.xlu0 %133, %v115
    %v135 = vpop.permute.xlu0 %134
    %136 = vset.pattern.permute.xlu0 0
    %137 = vperm.xlu0 %136, %v130
    %v138 = vpop.permute.xlu0 %137
    %v139 = vperm.slane %v135, %v60
    %v140 = vperm.slane %v138, %v60
    %v141 = vsel %vm63, %v140, %v139
    %143 = vst.msk [vmem:[#allocation7] sm:$0x3] %vm66, %v141
    // Predicated region
    $region18: #{tpu_custom_call.1} parent=1 // pred_check
      _
    $region19: #{tpu_custom_call.1} parent=1 // pred_check_branch
      %145 = sbr.rel (0) target = $region21
    $region20: #{tpu_custom_call.1} parent=1 // pred_region
      %147 = vsyncadd [#allocation4], 0
      %s149 = sshll.u32 [#allocation7], 4
      %s150 = int_to_ptr.vmem [resolvable:$true] %s149
      %s151 = sshll.u32 %s2, 4
      %s152 = int_to_ptr.hbm [resolvable:$true] %s151
      %154 = dma.vmem_to_hbm [thread:$0]  %s150, 32, %s152, [#allocation4]
    $region21: #{tpu_custom_call.1} parent=1 // pred_fallthru
      _
    // Predicated region
    $region22: #{tpu_custom_call.1} parent=1 // pred_check
      _
    $region23: #{tpu_custom_call.1} parent=1 // pred_check_branch
      %156 = sbr.rel (0) target = $region25
    $region24: #{tpu_custom_call.1} parent=1 // pred_region
      %158 = dma.done [#allocation4], 32
    $region25: #{tpu_custom_call.1} parent=1 // pred_fallthru
      _
    %159 = vsyncpa [#allocation3], 1
    %160 = vsyncpa [#allocation6], 1
    %161 = vsyncpa [#allocation4], 1

</llo_original>
